<compile_context>
chip_gen: v5e
topology: v5e:2x2
jax: 0.10.0
libtpu: 0.0.40
codegen_flags: <defaults>
</compile_context>

<pallas_src>
import functools

import jax
import jax.numpy as jnp
from jax.experimental import pallas as pl
from jax.experimental.pallas import tpu as pltpu


def _slotgat_kernel(h_ref,      # (B_C, T, N, F)   slot-major node features
                    w_ref,      # (F, Fo)          linear weight, stored as W^T
                    bias_ref,   # (1, Fo)          linear bias
                    a_ref,      # (1, Fo)          attention vector (row)
                    o_ref,      # (B_C, N, F)      output
                    *, inv_num_nodes, matmul_dtype):
    hv = h_ref[...]                                            # (Bc, T, N, F) f32
    Bc, T, N, F = hv.shape

    # --- MLP: s = tanh(h @ W + bias) as ONE big MXU matmul over all (c,t,n)
    #     rows.  Leading-dim collapse; layout-preserving when N % 8 == 0.
    h2 = hv.reshape(Bc * T * N, F)                             # (M, F)
    s = jnp.tanh(
        jnp.dot(h2.astype(matmul_dtype), w_ref[...].astype(matmul_dtype),
                preferred_element_type=jnp.float32)
        + bias_ref[...]
    )                                                          # (M, Fo) f32

    # --- attention logits: <s_row, a> via VPU multiply + lane (XLU) reduce.
    u = jnp.sum(s * a_ref[...], axis=-1, keepdims=True)        # (M, 1)
    u = u.reshape(Bc, T, N, 1)                                 # aligned expand

    # --- per (conformer, slot) logit: node sum (sublane reduce), divided by
    #     num_nodes BEFORE the softmax (required semantics).
    z = jnp.sum(u, axis=2, keepdims=True) * inv_num_nodes      # (Bc, T, 1, 1)

    # --- softmax over slots (leading axis T).
    m = jnp.max(z, axis=1, keepdims=True)                      # (Bc, 1, 1, 1)
    e = jnp.exp(z - m)
    wts = e / jnp.sum(e, axis=1, keepdims=True)                # (Bc, T, 1, 1)

    # --- slot-weighted aggregation: broadcast-multiply + leading-axis sum.
    o_ref[...] = jnp.sum(wts * hv, axis=1).astype(o_ref.dtype)  # (Bc, N, F)

    # TODO(synk): print_issue (NaN/Inf debug logging) is not reproduced in-kernel.


def _ceil_to(x, m):
    return -(-x // m) * m


def slotgat_attention(h, num_nodes, w_t, bias, attn_vec, *,
                      block_confs=None, matmul_dtype=jnp.float32):
    """h: (C, N, T, F) float32. Returns (C, N, F)."""
    C, N, T, F = h.shape
    Fo = w_t.shape[1]
    assert w_t.shape[0] == F
    assert attn_vec.shape[0] == Fo, "module's einsum requires in_feat == out_feat"

    # --- VMEM-padded footprints (last dim padded to 128 lanes, second-last to
    #     8 sublanes) of the per-conformer pieces that live in VMEM at once.
    f_pad = _ceil_to(F, 128)
    fo_pad = _ceil_to(Fo, 128)
    n_pad = _ceil_to(N, 8)
    per_conf = (2 * T * n_pad * f_pad * 4      # h block, double-buffered
                + T * n_pad * fo_pad * 4       # s intermediate
                + 2 * n_pad * f_pad * 4)       # output block, double-buffered

    if block_confs is None:
        budget = 28 << 20                      # leave headroom under 64 MiB (v7x)
        bc_cap = max(1, budget // max(1, per_conf))
    else:
        bc_cap = max(1, int(block_confs))
    bc_cap = min(bc_cap, C)
    num_blocks = -(-C // bc_cap)
    B_C = -(-C // num_blocks)                  # even block sizes -> minimal padding
    num_blocks = -(-C // B_C)
    C_pad = num_blocks * B_C

    # Slot-major layout per block: (C, T, N, F).  One XLA transpose of h; inside
    # the kernel every reshape is then an aligned leading-dim collapse/expand.
    h_t = jnp.transpose(h, (0, 2, 1, 3))
    if C_pad != C:
        # Zero-padded conformers are independent and their outputs are sliced away.
        h_t = jnp.pad(h_t, ((0, C_pad - C), (0, 0), (0, 0), (0, 0)))

    bias2 = bias.reshape(1, Fo)
    a_row = attn_vec.reshape(1, Fo)

    kernel = functools.partial(
        _slotgat_kernel,
        inv_num_nodes=1.0 / float(num_nodes),
        matmul_dtype=matmul_dtype,
    )

    # Explicit VMEM budget: blocks + params + slack, capped below physical VMEM
    # of the smallest target (v7x: 64 MiB per TensorCore).
    vmem_est = B_C * per_conf + (F * fo_pad + 2 * fo_pad) * 4 + (6 << 20)
    vmem_limit = int(min(max(vmem_est, 8 << 20), 60 << 20))

    out = pl.pallas_call(
        kernel,
        out_shape=jax.ShapeDtypeStruct((C_pad, N, F), h.dtype),
        grid=(num_blocks,),
        in_specs=[
            pl.BlockSpec((B_C, T, N, F), lambda c: (c, 0, 0, 0)),  # h (slot-major)
            pl.BlockSpec((F, Fo), lambda c: (0, 0)),               # W^T
            pl.BlockSpec((1, Fo), lambda c: (0, 0)),               # bias
            pl.BlockSpec((1, Fo), lambda c: (0, 0)),               # attn vector
        ],
        out_specs=pl.BlockSpec((B_C, N, F), lambda c: (c, 0, 0)),
        compiler_params=pltpu.CompilerParams(
            dimension_semantics=("parallel",),
            vmem_limit_bytes=vmem_limit,
        ),
    )(h_t, w_t, bias2, a_row)

    return out[:C]


def slotgat_reference(h, num_nodes, w_t, bias, attn_vec):
    s = jnp.tanh(h @ w_t + bias)                       # (C, N, T, Fo)
    b = jnp.einsum('cnti,i->cnt', s, attn_vec)
    b = b.sum(axis=1) / num_nodes
    b = jax.nn.softmax(b, axis=1)                      # (C, T)
    return jnp.sum(b[:, None, :, None] * h, axis=2)    # (C, N, F)


if __name__ == "__main__":
    # Small shapes consistent with the module's forward.
    C = 2          # num_confs
    N = 8          # num_nodes per conformer
    T = 4          # num_node_types (slots)
    F = 32         # in_feat == out_feat (required by the module's einsum)

    key = jax.random.PRNGKey(0)
    k_h, k_w, k_b, k_a = jax.random.split(key, 4)

    h = jax.random.normal(k_h, (C, N, T, F), dtype=jnp.float32)
    w_t = jax.random.normal(k_w, (F, F), dtype=jnp.float32) * 0.1    # stored as W^T
    bias = jax.random.normal(k_b, (F,), dtype=jnp.float32) * 0.1
    attn_vec = jax.random.normal(k_a, (F,), dtype=jnp.float32)

    num_nodes = N

    out = slotgat_attention(h, num_nodes, w_t, bias, attn_vec)
    out = jax.block_until_ready(out)

    ref = slotgat_reference(h, float(num_nodes), w_t, bias, attn_vec)
    assert out.shape == (C, N, F)
    assert jnp.allclose(out, ref, atol=1e-5, rtol=1e-5), float(jnp.max(jnp.abs(out - ref)))

    print("KERNEL_OK")
</pallas_src>

<mosaic_0001>
module attributes {stable_mosaic.version = 11 : i64} {
  func.func @_slotgat_kernel(%arg0: i32, %arg1: memref<2x4x8x32xf32, #tpu.memory_space<vmem>>, %arg2: memref<32x32xf32, #tpu.memory_space<vmem>>, %arg3: memref<1x32xf32, #tpu.memory_space<vmem>>, %arg4: memref<1x32xf32, #tpu.memory_space<vmem>>, %arg5: memref<2x8x32xf32, #tpu.memory_space<vmem>>) attributes {dimension_semantics = [#tpu.dimension_semantics<parallel>], iteration_bounds = array<i64: 1>, scalar_prefetch = 0 : i64, scratch_operands = 0 : i64, tpu.core_type = #tpu.core_type<tc>, window_params = [{transform_indices = @transform_0, window_bounds = array<i64: 2, 4, 8, 32>}, {pipeline_mode = #tpu.pipeline_mode<synchronous>, transform_indices = @transform_1, window_bounds = array<i64: 32, 32>}, {pipeline_mode = #tpu.pipeline_mode<synchronous>, transform_indices = @transform_2, window_bounds = array<i64: 1, 32>}, {pipeline_mode = #tpu.pipeline_mode<synchronous>, transform_indices = @transform_3, window_bounds = array<i64: 1, 32>}, {transform_indices = @transform_4, window_bounds = array<i64: 2, 8, 32>}]} {
    %c0 = arith.constant 0 : index
    %c0_0 = arith.constant 0 : index
    %c0_1 = arith.constant 0 : index
    %c0_2 = arith.constant 0 : index
    %0 = vector.load %arg1[%c0, %c0_0, %c0_1, %c0_2] : memref<2x4x8x32xf32, #tpu.memory_space<vmem>>, vector<2x4x8x32xf32>
    %1 = vector.shape_cast %0 : vector<2x4x8x32xf32> to vector<64x32xf32>
    %c0_3 = arith.constant 0 : index
    %c0_4 = arith.constant 0 : index
    %2 = vector.load %arg2[%c0_3, %c0_4] : memref<32x32xf32, #tpu.memory_space<vmem>>, vector<32x32xf32>
    %cst = arith.constant dense<0.000000e+00> : vector<64x32xf32>
    %3 = tpu.matmul %1, %2, %cst {dimension_numbers = #tpu.dot_dimension_numbers<[1], [0], [0], [1], [0, 0, 1, 1], [], []>} : vector<64x32xf32>, vector<32x32xf32>, vector<64x32xf32> -> vector<64x32xf32>
    %c0_5 = arith.constant 0 : index
    %c0_6 = arith.constant 0 : index
    %4 = vector.load %arg3[%c0_5, %c0_6] : memref<1x32xf32, #tpu.memory_space<vmem>>, vector<1x32xf32>
    %5 = vector.broadcast %4 : vector<1x32xf32> to vector<64x32xf32>
    %6 = arith.addf %3, %5 : vector<64x32xf32>
    %7 = math.tanh %6 : vector<64x32xf32>
    %c0_7 = arith.constant 0 : index
    %c0_8 = arith.constant 0 : index
    %8 = vector.load %arg4[%c0_7, %c0_8] : memref<1x32xf32, #tpu.memory_space<vmem>>, vector<1x32xf32>
    %9 = vector.broadcast %8 : vector<1x32xf32> to vector<64x32xf32>
    %10 = arith.mulf %7, %9 : vector<64x32xf32>
    %cst_9 = arith.constant dense<0.000000e+00> : vector<64xf32>
    %11 = vector.multi_reduction <add>, %10, %cst_9 [1] : vector<64x32xf32> to vector<64xf32>
    %12 = vector.shape_cast %11 : vector<64xf32> to vector<64x1xf32>
    %13 = vector.shape_cast %12 : vector<64x1xf32> to vector<2x4x8x1xf32>
    %cst_10 = arith.constant dense<0.000000e+00> : vector<2x4x1xf32>
    %14 = vector.multi_reduction <add>, %13, %cst_10 [2] : vector<2x4x8x1xf32> to vector<2x4x1xf32>
    %15 = vector.shape_cast %14 : vector<2x4x1xf32> to vector<2x4x1x1xf32>
    %cst_11 = arith.constant 1.250000e-01 : f32
    %16 = vector.broadcast %cst_11 : f32 to vector<2x4x1x1xf32>
    %17 = arith.mulf %15, %16 : vector<2x4x1x1xf32>
    %cst_12 = arith.constant dense<0xFF800000> : vector<2x1x1xf32>
    %18 = vector.multi_reduction <maximumf>, %17, %cst_12 [1] : vector<2x4x1x1xf32> to vector<2x1x1xf32>
    %19 = vector.shape_cast %18 : vector<2x1x1xf32> to vector<2x1x1x1xf32>
    %20 = vector.broadcast %19 : vector<2x1x1x1xf32> to vector<2x4x1x1xf32>
    %21 = arith.subf %17, %20 : vector<2x4x1x1xf32>
    %22 = math.exp %21 : vector<2x4x1x1xf32>
    %cst_13 = arith.constant dense<0.000000e+00> : vector<2x1x1xf32>
    %23 = vector.multi_reduction <add>, %22, %cst_13 [1] : vector<2x4x1x1xf32> to vector<2x1x1xf32>
    %24 = vector.shape_cast %23 : vector<2x1x1xf32> to vector<2x1x1x1xf32>
    %25 = vector.broadcast %24 : vector<2x1x1x1xf32> to vector<2x4x1x1xf32>
    %26 = arith.divf %22, %25 : vector<2x4x1x1xf32>
    %27 = vector.broadcast %26 : vector<2x4x1x1xf32> to vector<2x4x8x32xf32>
    %28 = arith.mulf %27, %0 : vector<2x4x8x32xf32>
    %cst_14 = arith.constant dense<0.000000e+00> : vector<2x8x32xf32>
    %29 = vector.multi_reduction <add>, %28, %cst_14 [1] : vector<2x4x8x32xf32> to vector<2x8x32xf32>
    %c0_15 = arith.constant 0 : index
    %c0_16 = arith.constant 0 : index
    %c0_17 = arith.constant 0 : index
    %30 = vector.load %arg5[%c0_15, %c0_16, %c0_17] : memref<2x8x32xf32, #tpu.memory_space<vmem>>, vector<2x8x32xf32>
    tpu.vector_store %arg5[%c0_15, %c0_16, %c0_17], %29 {strides = array<i32>} : memref<2x8x32xf32, #tpu.memory_space<vmem>>, vector<2x8x32xf32>,
    return
  }
  func.func @transform_0(%arg0: i32) -> (i32, i32, i32, i32) {
    %c0_i32 = arith.constant 0 : i32
    %c0_i32_0 = arith.constant 0 : i32
    %c0_i32_1 = arith.constant 0 : i32
    %c0_i32_2 = arith.constant 0 : i32
    return %arg0, %c0_i32, %c0_i32_0, %c0_i32_1 : i32, i32, i32, i32
  }
  func.func @transform_1(%arg0: i32) -> (i32, i32) {
    %c0_i32 = arith.constant 0 : i32
    %c0_i32_0 = arith.constant 0 : i32
    %c0_i32_1 = arith.constant 0 : i32
    return %c0_i32, %c0_i32_0 : i32, i32
  }
  func.func @transform_2(%arg0: i32) -> (i32, i32) {
    %c0_i32 = arith.constant 0 : i32
    %c0_i32_0 = arith.constant 0 : i32
    %c0_i32_1 = arith.constant 0 : i32
    return %c0_i32, %c0_i32_0 : i32, i32
  }
  func.func @transform_3(%arg0: i32) -> (i32, i32) {
    %c0_i32 = arith.constant 0 : i32
    %c0_i32_0 = arith.constant 0 : i32
    %c0_i32_1 = arith.constant 0 : i32
    return %c0_i32, %c0_i32_0 : i32, i32
  }
  func.func @transform_4(%arg0: i32) -> (i32, i32, i32) {
    %c0_i32 = arith.constant 0 : i32
    %c0_i32_0 = arith.constant 0 : i32
    %c0_i32_1 = arith.constant 0 : i32
    return %arg0, %c0_i32, %c0_i32_0 : i32, i32, i32
  }
}

</mosaic_0001>

<llo_original>
// kernel: tpu_custom_call.1
$region0: #{tpu_custom_call.1}
  #allocation0 [shape = 'u32[]', space=smem, size = 0x4, offset = 0x4, fixed_abs, tag = 'smem constant byte address 0x4 - core index']
  #allocation1 [shape = 'u32[72,128]{1,0:T(1,128)}', space=vmem, size = 0x9000, scoped, tag = 'internal scratch']
  %s0 = inlined_call_operand.hbm [shape: f32[2,4,8,32], index: 0, kind: input, shape index: {}]
  %s1 = inlined_call_operand.hbm [shape: f32[32,32], index: 1, kind: input, shape index: {}]
  %s2 = inlined_call_operand.vmem [shape: f32[1,32], index: 2, kind: input, shape index: {}]
  %s3 = inlined_call_operand.vmem [shape: f32[1,32], index: 3, kind: input, shape index: {}]
  %s4 = inlined_call_operand.hbm [shape: f32[2,8,32], index: 4, kind: output, shape index: {}]
  %s5 = sld [smem:[#allocation0]]
  $region34: #{tpu_custom_call.1} parent=0
    _
  %s7 = ssub.s32 1, %s5
  %s8 = scalar_select 0, %s7, %s5
  $region1: #{tpu_custom_call.1} parent=0
    #allocation2 [shape = 'u8[32768]{0}', space=vmem, size = 0x8000, scoped, tag = 'input window, operand 0, single buffered']
    #allocation3 [shape = 's32[1]{0}', space=sflag, size = 0x4, scoped, tag = 'scoped memory for tpu_custom_call.1']
    #allocation4 [shape = 's32[1]{0}', space=sflag, size = 0x4, scoped, tag = 'scoped memory for tpu_custom_call.1']
    #allocation5 [shape = 'u8[16384]{0}', space=vmem, size = 0x4000, scoped, tag = 'input window, operand 1, single buffered']
    #allocation6 [shape = 's32[1]{0}', space=sflag, size = 0x4, scoped, tag = 'scoped memory for tpu_custom_call.1']
    #allocation7 [shape = 'u8[8192]{0}', space=vmem, size = 0x2000, scoped, tag = 'output window, operand 0, single buffered']
    %9 = vsyncpa [#allocation3], 0
    %10 = vsyncpa [#allocation6], 0
    %11 = vsyncpa [#allocation4], 0
    // Predicated region
    $region2: #{tpu_custom_call.1} parent=1 // pred_check
      _
    $region3: #{tpu_custom_call.1} parent=1 // pred_check_branch
      %13 = sbr.rel (0) target = $region5
    $region4: #{tpu_custom_call.1} parent=1 // pred_region
      %15 = vsyncadd [#allocation3], 0
      %s16 = sshll.u32 %s0, 4
      %s17 = int_to_ptr.hbm [resolvable:$true] %s16
      %s18 = sshll.u32 [#allocation2], 4
      %s19 = int_to_ptr.vmem [resolvable:$true] %s18
      %24 = dma.hbm_to_vmem [thread:$0]  %s17, 1024, %s19, [#allocation3], 128, 128, 8
    $region5: #{tpu_custom_call.1} parent=1 // pred_fallthru
      _
    // Predicated region
    $region6: #{tpu_custom_call.1} parent=1 // pred_check
      _
    $region7: #{tpu_custom_call.1} parent=1 // pred_check_branch
      %26 = sbr.rel (0) target = $region9
    $region8: #{tpu_custom_call.1} parent=1 // pred_region
      %28 = vsyncadd [#allocation6], 0
      %s29 = sshll.u32 %s1, 4
      %s30 = int_to_ptr.hbm [resolvable:$true] %s29
      %s31 = sshll.u32 [#allocation5], 4
      %s32 = int_to_ptr.vmem [resolvable:$true] %s31
      %37 = dma.hbm_to_vmem [thread:$0]  %s30, 512, %s32, [#allocation6], 128, 128, 8
    $region9: #{tpu_custom_call.1} parent=1 // pred_fallthru
      _
    // Predicated region
    $region10: #{tpu_custom_call.1} parent=1 // pred_check
      _
    $region11: #{tpu_custom_call.1} parent=1 // pred_check_branch
      %39 = sbr.rel (0) target = $region13
    $region12: #{tpu_custom_call.1} parent=1 // pred_region
      _
    $region13: #{tpu_custom_call.1} parent=1 // pred_fallthru
      _
    // Predicated region
    $region14: #{tpu_custom_call.1} parent=1 // pred_check
      _
    $region15: #{tpu_custom_call.1} parent=1 // pred_check_branch
      %41 = sbr.rel (0) target = $region17
    $region16: #{tpu_custom_call.1} parent=1 // pred_region
      _
    $region17: #{tpu_custom_call.1} parent=1 // pred_fallthru
      _
    // Predicated region
    $region18: #{tpu_custom_call.1} parent=1 // pred_check
      _
    $region19: #{tpu_custom_call.1} parent=1 // pred_check_branch
      %43 = sbr.rel (0) target = $region21
    $region20: #{tpu_custom_call.1} parent=1 // pred_region
      %45 = dma.done [#allocation3], 1024
    $region21: #{tpu_custom_call.1} parent=1 // pred_fallthru
      _
    // Predicated region
    $region22: #{tpu_custom_call.1} parent=1 // pred_check
      _
    $region23: #{tpu_custom_call.1} parent=1 // pred_check_branch
      %47 = sbr.rel (0) target = $region25
    $region24: #{tpu_custom_call.1} parent=1 // pred_region
      %49 = dma.done [#allocation6], 512
    $region25: #{tpu_custom_call.1} parent=1 // pred_fallthru
      _
    %v50 = vld [vmem:[#allocation2] sm:$0xff]
    %v51 = vld [vmem:[#allocation2 + $0x8] sm:$0xff]
    %v52 = vld [vmem:[#allocation2 + $0x10] sm:$0xff]
    %v53 = vld [vmem:[#allocation2 + $0x18] sm:$0xff]
    %v54 = vld [vmem:[#allocation2 + $0x20] sm:$0xff]
    %v55 = vld [vmem:[#allocation2 + $0x28] sm:$0xff]
    %v56 = vld [vmem:[#allocation2 + $0x30] sm:$0xff]
    %v57 = vld [vmem:[#allocation2 + $0x38] sm:$0xff]
    %v58 = vld [vmem:[#allocation5] sm:$0xff]
    %v59 = vld [vmem:[#allocation5 + $0x8] sm:$0xff]
    %v60 = vld [vmem:[#allocation5 + $0x10] sm:$0xff]
    %v61 = vld [vmem:[#allocation5 + $0x18] sm:$0xff]
    %v62 = vld [vmem:[%s2] sm:$0x1]
    %v64 = vperm.slane %v62, 0
    %vm66 = vcmask 261120
    %v68 = vsel %vm66, %v50, 0
    %v71 = vsel %vm66, %v51, 0
    %v74 = vsel %vm66, %v52, 0
    %v77 = vsel %vm66, %v53, 0
    %v80 = vsel %vm66, %v54, 0
    %v83 = vsel %vm66, %v55, 0
    %v86 = vsel %vm66, %v56, 0
    %v89 = vsel %vm66, %v57, 0
    %91 = vmatpush.msra.mxu0 0.0
    %92 = vmatpush.msra.mxu0 0.0
    %93 = vmatpush.msra.mxu0 0.0
    %94 = vmatpush.msra.mxu0 0.0
    %95 = vmatpush.msra.mxu0 0.0
    %96 = vmatpush.msra.mxu0 0.0
    %97 = vmatpush.msra.mxu0 0.0
    %98 = vmatpush.msra.mxu0 0.0
    %99 = vmatpush.msra.mxu0 0.0
    %100 = vmatpush.msra.mxu0 0.0
    %101 = vmatpush.msra.mxu0 0.0
    %102 = vmatpush.msra.mxu0 0.0
    %103 = vmatpush.msra.mxu0 %v61
    %104 = vmatpush.msra.mxu0 %v60
    %105 = vmatpush.msra.mxu0 %v59
    %106 = vmatpush.msra.mxu0 %v58
    %107 = vmatmul.f32.gmra.mxu0 %v68
    %v108 = vpop.f32.mrf.mxu0
    %v109 = vadd.f32 %v64, %v108
    %110 = vmatmul.f32.gmra.mxu0 %v71
    %v111 = vpop.f32.mrf.mxu0
    %v112 = vadd.f32 %v64, %v111
    %113 = vmatmul.f32.gmra.mxu0 %v74
    %v114 = vpop.f32.mrf.mxu0
    %v115 = vadd.f32 %v64, %v114
    %116 = vmatmul.f32.gmra.mxu0 %v77
    %v117 = vpop.f32.mrf.mxu0
    %v118 = vadd.f32 %v64, %v117
    %119 = vmatmul.f32.gmra.mxu0 %v80
    %v120 = vpop.f32.mrf.mxu0
    %v121 = vadd.f32 %v64, %v120
    %122 = vmatmul.f32.gmra.mxu0 %v83
    %v123 = vpop.f32.mrf.mxu0
    %v124 = vadd.f32 %v64, %v123
    %125 = vmatmul.f32.gmra.mxu0 %v86
    %v126 = vpop.f32.mrf.mxu0
    %v127 = vadd.f32 %v64, %v126
    %128 = vmatmul.f32.gmra.mxu0 %v89
    %v129 = vpop.f32.mrf.mxu0
    %v130 = vadd.f32 %v64, %v129
    %131 = vdwg.mxu0
    %v132 = vtanh.pop %v109
    %v133 = vtanh.pop %v112
    %v134 = vtanh.pop %v115
    %v135 = vtanh.pop %v118
    %v136 = vtanh.pop %v121
    %v137 = vtanh.pop %v124
    %v138 = vtanh.pop %v127
    %v139 = vtanh.pop %v130
    %v140 = vld [vmem:[%s3] sm:$0x1]
    %v142 = vperm.slane %v140, 0
    %v144 = vmul.f32 %v132, %v142
    %v145 = vmul.f32 %v133, %v142
    %v146 = vmul.f32 %v134, %v142
    %v147 = vmul.f32 %v135, %v142
    %v148 = vmul.f32 %v136, %v142
    %v149 = vmul.f32 %v137, %v142
    %v150 = vmul.f32 %v138, %v142
    %v151 = vmul.f32 %v139, %v142
    %v152 = vsel %vm66, %v144, 0.0
    %153 = vadd.xlane.f32.xlu0 %v152
    %v154 = vpop.xlane.xlu0 %153
    %v155 = vsel %vm66, %v145, 0.0
    %156 = vadd.xlane.f32.xlu0 %v155
    %v157 = vpop.xlane.xlu0 %156
    %v158 = vsel %vm66, %v146, 0.0
    %159 = vadd.xlane.f32.xlu0 %v158
    %v160 = vpop.xlane.xlu0 %159
    %v161 = vsel %vm66, %v147, 0.0
    %162 = vadd.xlane.f32.xlu0 %v161
    %v163 = vpop.xlane.xlu0 %162
    %v164 = vsel %vm66, %v148, 0.0
    %165 = vadd.xlane.f32.xlu0 %v164
    %v166 = vpop.xlane.xlu0 %165
    %v167 = vsel %vm66, %v149, 0.0
    %168 = vadd.xlane.f32.xlu0 %v167
    %v169 = vpop.xlane.xlu0 %168
    %v170 = vsel %vm66, %v150, 0.0
    %171 = vadd.xlane.f32.xlu0 %v170
    %v172 = vpop.xlane.xlu0 %171
    %v173 = vsel %vm66, %v151, 0.0
    %174 = vadd.xlane.f32.xlu0 %v173
    %v175 = vpop.xlane.xlu0 %174
    %v176 = vrot.slane %v154, 4
    %v177 = vadd.f32 %v154, %v176
    %v178 = vrot.slane %v177, 2
    %v179 = vadd.f32 %v177, %v178
    %v180 = vrot.slane %v179, 1
    %v181 = vadd.f32 %v179, %v180
    %v182 = vrot.slane %v157, 4
    %v183 = vadd.f32 %v157, %v182
    %v184 = vrot.slane %v183, 2
    %v185 = vadd.f32 %v183, %v184
    %v186 = vrot.slane %v185, 1
    %v187 = vadd.f32 %v185, %v186
    %v188 = vrot.slane %v160, 4
    %v189 = vadd.f32 %v160, %v188
    %v190 = vrot.slane %v189, 2
    %v191 = vadd.f32 %v189, %v190
    %v192 = vrot.slane %v191, 1
    %v193 = vadd.f32 %v191, %v192
    %v194 = vrot.slane %v163, 4
    %v195 = vadd.f32 %v163, %v194
    %v196 = vrot.slane %v195, 2
    %v197 = vadd.f32 %v195, %v196
    %v198 = vrot.slane %v197, 1
    %v199 = vadd.f32 %v197, %v198
    %v200 = vrot.slane %v166, 4
    %v201 = vadd.f32 %v166, %v200
    %v202 = vrot.slane %v201, 2
    %v203 = vadd.f32 %v201, %v202
    %v204 = vrot.slane %v203, 1
    %v205 = vadd.f32 %v203, %v204
    %v206 = vrot.slane %v169, 4
    %v207 = vadd.f32 %v169, %v206
    %v208 = vrot.slane %v207, 2
    %v209 = vadd.f32 %v207, %v208
    %v210 = vrot.slane %v209, 1
    %v211 = vadd.f32 %v209, %v210
    %v212 = vrot.slane %v172, 4
    %v213 = vadd.f32 %v172, %v212
    %v214 = vrot.slane %v213, 2
    %v215 = vadd.f32 %v213, %v214
    %v216 = vrot.slane %v215, 1
    %v217 = vadd.f32 %v215, %v216
    %v218 = vrot.slane %v175, 4
    %v219 = vadd.f32 %v175, %v218
    %v220 = vrot.slane %v219, 2
    %v221 = vadd.f32 %v219, %v220
    %v222 = vrot.slane %v221, 1
    %v223 = vadd.f32 %v221, %v222
    %v224 = vmul.f32 %v181, 0.125
    %v225 = vmul.f32 %v187, 0.125
    %v226 = vmul.f32 %v193, 0.125
    %v227 = vmul.f32 %v199, 0.125
    %v228 = vmul.f32 %v205, 0.125
    %v229 = vmul.f32 %v211, 0.125
    %v230 = vmul.f32 %v217, 0.125
    %v231 = vmul.f32 %v223, 0.125
    %v232 = vmax.f32 %v224, %v226
    %v233 = vmax.f32 %v225, %v227
    %v234 = vmax.f32 %v232, %v233
    %v235 = vmax.f32 %v228, %v230
    %v236 = vmax.f32 %v229, %v231
    %v237 = vmax.f32 %v235, %v236
    %v238 = vsub.f32 %v224, %v234
    %v239 = vsub.f32 %v225, %v234
    %v240 = vsub.f32 %v226, %v234
    %v241 = vsub.f32 %v227, %v234
    %v242 = vsub.f32 %v228, %v237
    %v243 = vsub.f32 %v229, %v237
    %v244 = vsub.f32 %v230, %v237
    %v245 = vsub.f32 %v231, %v237
    %v246 = vmul.f32 %v238, 1.442695
    %v247 = vpow.pop %v246
    %v248 = vmul.f32 %v239, 1.442695
    %v249 = vpow.pop %v248
    %v250 = vmul.f32 %v240, 1.442695
    %v251 = vpow.pop %v250
    %v252 = vmul.f32 %v241, 1.442695
    %v253 = vpow.pop %v252
    %v254 = vmul.f32 %v242, 1.442695
    %v255 = vpow.pop %v254
    %v256 = vmul.f32 %v243, 1.442695
    %v257 = vpow.pop %v256
    %v258 = vmul.f32 %v244, 1.442695
    %v259 = vpow.pop %v258
    %v260 = vmul.f32 %v245, 1.442695
    %v261 = vpow.pop %v260
    %v262 = vadd.f32 %v247, %v249
    %v263 = vadd.f32 %v262, %v251
    %v264 = vadd.f32 %v263, %v253
    %v265 = vadd.f32 %v255, %v257
    %v266 = vadd.f32 %v265, %v259
    %v267 = vadd.f32 %v266, %v261
    %v268 = vrcp.pop %v264
    %v269 = vmul.f32 %v264, %v268
    %v270 = vsub.f32 1.0, %v269
    %v271 = vmul.f32 %v268, %v270
    %v272 = vadd.f32 %v268, %v271
    %vm273 = vweird.f32 %v264
    %vm274 = vweird.f32 %v268
    %vm275 = vmor %vm273, %vm274
    %v276 = vsel %vm275, %v268, %v272
    %v277 = vand.u32 2147483647, %v264
    %vm278 = vcmp.eq.f32.partialorder %v277, 8.507059e+37
    %v279 = vand.u32 %v264, 2147483648
    %v280 = vor.u32 1.1754944e-38, %v279
    %v281 = vsel %vm278, %v280, %v276
    %v282 = vmul.f32 %v247, %v281
    %v283 = vmul.f32 %v249, %v281
    %v284 = vmul.f32 %v251, %v281
    %v285 = vmul.f32 %v253, %v281
    %v286 = vrcp.pop %v267
    %v287 = vmul.f32 %v267, %v286
    %v288 = vsub.f32 1.0, %v287
    %v289 = vmul.f32 %v286, %v288
    %v290 = vadd.f32 %v286, %v289
    %vm291 = vweird.f32 %v267
    %vm292 = vweird.f32 %v286
    %vm293 = vmor %vm291, %vm292
    %v294 = vsel %vm293, %v286, %v290
    %v295 = vand.u32 2147483647, %v267
    %vm296 = vcmp.eq.f32.partialorder %v295, 8.507059e+37
    %v297 = vand.u32 %v267, 2147483648
    %v298 = vor.u32 1.1754944e-38, %v297
    %v299 = vsel %vm296, %v298, %v294
    %v300 = vmul.f32 %v255, %v299
    %v301 = vmul.f32 %v257, %v299
    %v302 = vmul.f32 %v259, %v299
    %v303 = vmul.f32 %v261, %v299
    %v304 = vmul.f32 %v282, %v50
    %v305 = vmul.f32 %v283, %v51
    %v306 = vmul.f32 %v284, %v52
    %v307 = vmul.f32 %v285, %v53
    %v308 = vmul.f32 %v300, %v54
    %v309 = vmul.f32 %v301, %v55
    %v310 = vmul.f32 %v302, %v56
    %v311 = vmul.f32 %v303, %v57
    %v312 = vsel %vm66, %v304, 0.0
    %v313 = vsel %vm66, %v305, 0.0
    %v314 = vadd.f32 %v312, %v313
    %v315 = vsel %vm66, %v306, 0.0
    %v316 = vadd.f32 %v314, %v315
    %v317 = vsel %vm66, %v307, 0.0
    %v318 = vadd.f32 %v316, %v317
    %v319 = vsel %vm66, %v308, 0.0
    %v320 = vsel %vm66, %v309, 0.0
    %v321 = vadd.f32 %v319, %v320
    %v322 = vsel %vm66, %v310, 0.0
    %v323 = vadd.f32 %v321, %v322
    %v324 = vsel %vm66, %v311, 0.0
    %v325 = vadd.f32 %v323, %v324
    %326 = vst.msk [vmem:[#allocation7] sm:$0xff] %vm66, %v318
    %327 = vst.msk [vmem:[#allocation7 + $0x8] sm:$0xff] %vm66, %v325
    // Predicated region
    $region26: #{tpu_custom_call.1} parent=1 // pred_check
      _
    $region27: #{tpu_custom_call.1} parent=1 // pred_check_branch
      %329 = sbr.rel (0) target = $region29
    $region28: #{tpu_custom_call.1} parent=1 // pred_region
      %331 = vsyncadd [#allocation4], 0
      %s332 = sshll.u32 [#allocation7], 4
      %s333 = int_to_ptr.vmem [resolvable:$true] %s332
      %s334 = sshll.u32 %s4, 4
      %s335 = int_to_ptr.hbm [resolvable:$true] %s334
      %340 = dma.vmem_to_hbm [thread:$0]  %s333, 256, %s335, [#allocation4], 128, 128, 8
    $region29: #{tpu_custom_call.1} parent=1 // pred_fallthru
      _
    // Predicated region
    $region30: #{tpu_custom_call.1} parent=1 // pred_check
      _
    $region31: #{tpu_custom_call.1} parent=1 // pred_check_branch
      %342 = sbr.rel (0) target = $region33
    $region32: #{tpu_custom_call.1} parent=1 // pred_region
      %344 = dma.done [#allocation4], 256
    $region33: #{tpu_custom_call.1} parent=1 // pred_fallthru
      _
    %345 = vsyncpa [#allocation3], 1
    %346 = vsyncpa [#allocation6], 1
    %347 = vsyncpa [#allocation4], 1

</llo_original>
